<compile_context>
chip_gen: v7x
topology: tpu7x:2x2x1
jax: 0.10.0
libtpu: 0.0.40
codegen_flags: <defaults>
</compile_context>

<pallas_src>
import jax
import jax.numpy as jnp
from jax.experimental import pallas as pl
from jax.experimental.pallas import tpu as pltpu


def _round_up(x, m):
    return ((x + m - 1) // m) * m


def pose_classifier_kernel(x_ref, w1_ref, b1_ref, w2_ref, b2_ref, w3t_ref, b3t_ref, o_ref):
    # x_ref: (tm, 99) raw f32 rows straight from HBM; cast to bf16 in-kernel
    # (cheap VPU op) so the wrapper never re-materializes the input.
    x = x_ref[...].astype(jnp.bfloat16)

    # Layer 1: Linear(99 -> 128) + ReLU (bf16 MXU, f32 accumulate; Mosaic masks
    # the non-128-aligned contraction dim).
    h1 = jnp.dot(x, w1_ref[...], preferred_element_type=jnp.float32) + b1_ref[...]
    h1 = jnp.maximum(h1, 0.0).astype(jnp.bfloat16)

    # Layer 2: Linear(128 -> 128 [64 real + 64 zero-pad]) + ReLU.
    # Padded columns are exactly ReLU(0 + 0) = 0 and meet zero w3t columns.
    h2 = jnp.dot(h1, w2_ref[...], preferred_element_type=jnp.float32) + b2_ref[...]
    h2 = jnp.maximum(h2, 0.0)

    # Layer 3 computed transposed so the output store is lane-dense:
    #   (nc, 128) @ (128, tm) -> (nc, tm).  f32 transpose -> XLU (idle here).
    h2t = jnp.transpose(h2).astype(jnp.bfloat16)
    logits_t = jnp.dot(w3t_ref[...], h2t, preferred_element_type=jnp.float32) + b3t_ref[...]

    o_ref[...] = logits_t.astype(o_ref.dtype)


def init_params(key, input_dim=99, num_classes=3):
    """Unpadded f32 params (weights stored [in, out]); uniform(+-1/sqrt(fan_in)) like nn.Linear."""
    dims = [(input_dim, 128), (128, 64), (64, num_classes)]
    params = {}
    keys = jax.random.split(key, 2 * len(dims))
    for i, (fan_in, fan_out) in enumerate(dims):
        bound = 1.0 / jnp.sqrt(jnp.float32(fan_in))
        params[f"w{i+1}"] = jax.random.uniform(keys[2 * i], (fan_in, fan_out), jnp.float32, -bound, bound)
        params[f"b{i+1}"] = jax.random.uniform(keys[2 * i + 1], (1, fan_out), jnp.float32, -bound, bound)
    return params


def prepare_params(params, h_pad=128):
    """One-time weight prep: bf16 cast, hidden2 padded to 128, last layer stored transposed."""
    d_in, h1 = params["w1"].shape          # (99, 128)
    h2 = params["w2"].shape[1]             # 64
    nc = params["w3"].shape[1]             # 3
    w1 = params["w1"].astype(jnp.bfloat16)                                  # (99, 128), unpadded
    b1 = params["b1"].astype(jnp.float32).reshape(1, h1)
    w2 = jnp.zeros((h1, h_pad), jnp.bfloat16).at[:, :h2].set(params["w2"].astype(jnp.bfloat16))
    b2 = jnp.zeros((1, h_pad), jnp.float32).at[:, :h2].set(params["b2"].reshape(1, h2).astype(jnp.float32))
    # Last layer transposed: (nc, h_pad); zero cols [h2:] pair with exactly-zero padded activations.
    w3t = jnp.zeros((nc, h_pad), jnp.bfloat16).at[:, :h2].set(params["w3"].T.astype(jnp.bfloat16))
    b3t = params["b3"].reshape(nc, 1).astype(jnp.float32)
    return {"w1": w1, "b1": b1, "w2": w2, "b2": b2, "w3t": w3t, "b3t": b3t}


def _pick_tm(B):
    if B <= 128:
        return B  # single full-extent tile
    # Multiple of 128 (lane-dense transposed output block, bf16 sublane packing),
    # capped at 2048, aiming for >= ~8 grid steps for pipelining / v7x megacore.
    return min(2048, max(128, _round_up(pl.cdiv(B, 8), 128)))


def pose_classifier_forward(x, pparams, tm=None):
    """x: (B, input_dim) float32. pparams: output of prepare_params. Returns (B, num_classes) f32."""
    B, d_in = x.shape
    h1 = pparams["w1"].shape[1]
    h2p = pparams["w2"].shape[1]
    nc = pparams["w3t"].shape[0]

    if tm is None:
        tm = _pick_tm(B)
    assert tm == B or tm % 128 == 0, "tm must be a multiple of 128 (or equal B)"
    grid = pl.cdiv(B, tm)

    flops = 2 * B * (d_in * h1 + h1 * h2p + h2p * nc)
    bytes_accessed = (
        B * d_in * 4                              # f32 input stream (single HBM pass)
        + B * nc * 4                              # f32 logits out (lane-dense)
        + (d_in * h1 + h1 * h2p + nc * h2p) * 2   # bf16 weights (VMEM resident)
        + (h1 + h2p + nc) * 4                     # f32 biases
    )

    out_t = pl.pallas_call(
        pose_classifier_kernel,
        out_shape=jax.ShapeDtypeStruct((nc, B), jnp.float32),
        grid=(grid,),
        in_specs=[
            pl.BlockSpec((tm, d_in), lambda i: (i, 0)),   # x rows stream (raw f32, no wrapper pass)
            pl.BlockSpec((d_in, h1), lambda i: (0, 0)),   # weights: constant block -> resident
            pl.BlockSpec((1, h1), lambda i: (0, 0)),
            pl.BlockSpec((h1, h2p), lambda i: (0, 0)),
            pl.BlockSpec((1, h2p), lambda i: (0, 0)),
            pl.BlockSpec((nc, h2p), lambda i: (0, 0)),
            pl.BlockSpec((nc, 1), lambda i: (0, 0)),
        ],
        out_specs=pl.BlockSpec((nc, tm), lambda i: (0, i)),
        compiler_params=pltpu.CompilerParams(dimension_semantics=("parallel",)),
        cost_estimate=pl.CostEstimate(flops=flops, transcendentals=0, bytes_accessed=bytes_accessed),
    )(x, pparams["w1"], pparams["b1"], pparams["w2"], pparams["b2"], pparams["w3t"], pparams["b3t"])

    # Tiny (nc, B) -> (B, nc) transpose; output bytes are ~3% of input bytes.
    return out_t.T


def reference_forward(x, params):
    """Plain-JAX reference mimicking the kernel's bf16-in / f32-accumulate numerics."""
    q = lambda a: a.astype(jnp.bfloat16).astype(jnp.float32)
    h1 = jnp.maximum(q(x) @ q(params["w1"]) + params["b1"], 0.0)
    h2 = jnp.maximum(q(h1) @ q(params["w2"]) + params["b2"], 0.0)
    return q(h2) @ q(params["w3"]) + params["b3"]


if __name__ == "__main__":
    key = jax.random.PRNGKey(0)
    k_x, k_x2, k_p = jax.random.split(key, 3)

    input_dim, num_classes = 99, 3
    params = init_params(k_p, input_dim=input_dim, num_classes=num_classes)
    pparams = prepare_params(params)

    # Small-batch check (single full-extent tile, grid=1).
    B = 8
    x = jax.random.normal(k_x, (B, input_dim), dtype=jnp.float32)
    out = jax.block_until_ready(pose_classifier_forward(x, pparams))
    ref = reference_forward(x, params)
    assert out.shape == (B, num_classes)
    assert jnp.allclose(out, ref, atol=2e-2, rtol=2e-2)

    # Multi-tile check (grid=2, exercises the cdiv remainder / masked-edge path).
    B2 = 200
    x2 = jax.random.normal(k_x2, (B2, input_dim), dtype=jnp.float32)
    out2 = jax.block_until_ready(pose_classifier_forward(x2, pparams))
    ref2 = reference_forward(x2, params)
    assert out2.shape == (B2, num_classes)
    assert jnp.allclose(out2, ref2, atol=2e-2, rtol=2e-2)

    print("KERNEL_OK")
</pallas_src>

<mosaic_0001>
module attributes {stable_mosaic.version = 11 : i64} {
  func.func @pose_classifier_kernel(%arg0: i32, %arg1: memref<8x99xf32, #tpu.memory_space<vmem>>, %arg2: memref<99x128xbf16, #tpu.memory_space<vmem>>, %arg3: memref<1x128xf32, #tpu.memory_space<vmem>>, %arg4: memref<128x128xbf16, #tpu.memory_space<vmem>>, %arg5: memref<1x128xf32, #tpu.memory_space<vmem>>, %arg6: memref<3x128xbf16, #tpu.memory_space<vmem>>, %arg7: memref<3x1xf32, #tpu.memory_space<vmem>>, %arg8: memref<3x8xf32, #tpu.memory_space<vmem>>) attributes {dimension_semantics = [#tpu.dimension_semantics<parallel>], iteration_bounds = array<i64: 1>, scalar_prefetch = 0 : i64, scratch_operands = 0 : i64, tpu.core_type = #tpu.core_type<tc>, window_params = [{transform_indices = @transform_0, window_bounds = array<i64: 8, 99>}, {pipeline_mode = #tpu.pipeline_mode<synchronous>, transform_indices = @transform_1, window_bounds = array<i64: 99, 128>}, {pipeline_mode = #tpu.pipeline_mode<synchronous>, transform_indices = @transform_2, window_bounds = array<i64: 1, 128>}, {pipeline_mode = #tpu.pipeline_mode<synchronous>, transform_indices = @transform_3, window_bounds = array<i64: 128, 128>}, {pipeline_mode = #tpu.pipeline_mode<synchronous>, transform_indices = @transform_4, window_bounds = array<i64: 1, 128>}, {pipeline_mode = #tpu.pipeline_mode<synchronous>, transform_indices = @transform_5, window_bounds = array<i64: 3, 128>}, {pipeline_mode = #tpu.pipeline_mode<synchronous>, transform_indices = @transform_6, window_bounds = array<i64: 3, 1>}, {transform_indices = @transform_7, window_bounds = array<i64: 3, 8>}]} {
    %c0 = arith.constant 0 : index
    %c0_0 = arith.constant 0 : index
    %0 = vector.load %arg1[%c0, %c0_0] : memref<8x99xf32, #tpu.memory_space<vmem>>, vector<8x99xf32>
    %1 = arith.truncf %0 : vector<8x99xf32> to vector<8x99xbf16>
    %c0_1 = arith.constant 0 : index
    %c0_2 = arith.constant 0 : index
    %2 = vector.load %arg2[%c0_1, %c0_2] : memref<99x128xbf16, #tpu.memory_space<vmem>>, vector<99x128xbf16>
    %cst = arith.constant dense<0.000000e+00> : vector<8x128xf32>
    %3 = tpu.matmul %1, %2, %cst {dimension_numbers = #tpu.dot_dimension_numbers<[1], [0], [0], [1], [0, 0, 1, 1], [], []>} : vector<8x99xbf16>, vector<99x128xbf16>, vector<8x128xf32> -> vector<8x128xf32>
    %c0_3 = arith.constant 0 : index
    %c0_4 = arith.constant 0 : index
    %4 = vector.load %arg3[%c0_3, %c0_4] : memref<1x128xf32, #tpu.memory_space<vmem>>, vector<1x128xf32>
    %5 = vector.broadcast %4 : vector<1x128xf32> to vector<8x128xf32>
    %6 = arith.addf %3, %5 : vector<8x128xf32>
    %cst_5 = arith.constant 0.000000e+00 : f32
    %7 = vector.broadcast %cst_5 : f32 to vector<8x128xf32>
    %8 = arith.maximumf %6, %7 : vector<8x128xf32>
    %9 = arith.truncf %8 : vector<8x128xf32> to vector<8x128xbf16>
    %c0_6 = arith.constant 0 : index
    %c0_7 = arith.constant 0 : index
    %10 = vector.load %arg4[%c0_6, %c0_7] : memref<128x128xbf16, #tpu.memory_space<vmem>>, vector<128x128xbf16>
    %cst_8 = arith.constant dense<0.000000e+00> : vector<8x128xf32>
    %11 = tpu.matmul %9, %10, %cst_8 {dimension_numbers = #tpu.dot_dimension_numbers<[1], [0], [0], [1], [0, 0, 1, 1], [], []>} : vector<8x128xbf16>, vector<128x128xbf16>, vector<8x128xf32> -> vector<8x128xf32>
    %c0_9 = arith.constant 0 : index
    %c0_10 = arith.constant 0 : index
    %12 = vector.load %arg5[%c0_9, %c0_10] : memref<1x128xf32, #tpu.memory_space<vmem>>, vector<1x128xf32>
    %13 = vector.broadcast %12 : vector<1x128xf32> to vector<8x128xf32>
    %14 = arith.addf %11, %13 : vector<8x128xf32>
    %cst_11 = arith.constant 0.000000e+00 : f32
    %15 = vector.broadcast %cst_11 : f32 to vector<8x128xf32>
    %16 = arith.maximumf %14, %15 : vector<8x128xf32>
    %17 = tpu.transpose %16, [1, 0] : vector<8x128xf32> -> vector<128x8xf32>
    %18 = arith.truncf %17 : vector<128x8xf32> to vector<128x8xbf16>
    %c0_12 = arith.constant 0 : index
    %c0_13 = arith.constant 0 : index
    %19 = vector.load %arg6[%c0_12, %c0_13] : memref<3x128xbf16, #tpu.memory_space<vmem>>, vector<3x128xbf16>
    %cst_14 = arith.constant dense<0.000000e+00> : vector<3x8xf32>
    %20 = tpu.matmul %19, %18, %cst_14 {dimension_numbers = #tpu.dot_dimension_numbers<[1], [0], [0], [1], [0, 0, 1, 1], [], []>} : vector<3x128xbf16>, vector<128x8xbf16>, vector<3x8xf32> -> vector<3x8xf32>
    %c0_15 = arith.constant 0 : index
    %c0_16 = arith.constant 0 : index
    %21 = vector.load %arg7[%c0_15, %c0_16] : memref<3x1xf32, #tpu.memory_space<vmem>>, vector<3x1xf32>
    %22 = vector.broadcast %21 : vector<3x1xf32> to vector<3x8xf32>
    %23 = arith.addf %20, %22 : vector<3x8xf32>
    %c0_17 = arith.constant 0 : index
    %c0_18 = arith.constant 0 : index
    %24 = vector.load %arg8[%c0_17, %c0_18] : memref<3x8xf32, #tpu.memory_space<vmem>>, vector<3x8xf32>
    tpu.vector_store %arg8[%c0_17, %c0_18], %23 {strides = array<i32>} : memref<3x8xf32, #tpu.memory_space<vmem>>, vector<3x8xf32>,
    return
  }
  func.func @transform_0(%arg0: i32) -> (i32, i32) {
    %c0_i32 = arith.constant 0 : i32
    %c0_i32_0 = arith.constant 0 : i32
    return %arg0, %c0_i32 : i32, i32
  }
  func.func @transform_1(%arg0: i32) -> (i32, i32) {
    %c0_i32 = arith.constant 0 : i32
    %c0_i32_0 = arith.constant 0 : i32
    %c0_i32_1 = arith.constant 0 : i32
    return %c0_i32, %c0_i32_0 : i32, i32
  }
  func.func @transform_2(%arg0: i32) -> (i32, i32) {
    %c0_i32 = arith.constant 0 : i32
    %c0_i32_0 = arith.constant 0 : i32
    %c0_i32_1 = arith.constant 0 : i32
    return %c0_i32, %c0_i32_0 : i32, i32
  }
  func.func @transform_3(%arg0: i32) -> (i32, i32) {
    %c0_i32 = arith.constant 0 : i32
    %c0_i32_0 = arith.constant 0 : i32
    %c0_i32_1 = arith.constant 0 : i32
    return %c0_i32, %c0_i32_0 : i32, i32
  }
  func.func @transform_4(%arg0: i32) -> (i32, i32) {
    %c0_i32 = arith.constant 0 : i32
    %c0_i32_0 = arith.constant 0 : i32
    %c0_i32_1 = arith.constant 0 : i32
    return %c0_i32, %c0_i32_0 : i32, i32
  }
  func.func @transform_5(%arg0: i32) -> (i32, i32) {
    %c0_i32 = arith.constant 0 : i32
    %c0_i32_0 = arith.constant 0 : i32
    %c0_i32_1 = arith.constant 0 : i32
    return %c0_i32, %c0_i32_0 : i32, i32
  }
  func.func @transform_6(%arg0: i32) -> (i32, i32) {
    %c0_i32 = arith.constant 0 : i32
    %c0_i32_0 = arith.constant 0 : i32
    %c0_i32_1 = arith.constant 0 : i32
    return %c0_i32, %c0_i32_0 : i32, i32
  }
  func.func @transform_7(%arg0: i32) -> (i32, i32) {
    %c0_i32 = arith.constant 0 : i32
    %c0_i32_0 = arith.constant 0 : i32
    return %c0_i32, %arg0 : i32, i32
  }
}

</mosaic_0001>

<llo_original>
// kernel: tpu_custom_call.1
$region0: #{tpu_custom_call.1}
  #allocation0 [shape = 'u32[]', space=smem, size = 0x4, offset = 0x4, fixed_abs, tag = 'smem constant byte address 0x4 - core index']
  #allocation1 [shape = 'u32[144,128]{1,0:T(1,128)}', space=vmem, size = 0x12000, scoped, tag = 'internal scratch']
  %s0 = inlined_call_operand.hbm [shape: f32[8,99], index: 0, kind: input, shape index: {}]
  %s1 = inlined_call_operand.hbm [shape: bf16[99,128], index: 1, kind: input, shape index: {}]
  %s2 = inlined_call_operand.vmem [shape: f32[1,128], index: 2, kind: input, shape index: {}]
  %s3 = inlined_call_operand.hbm [shape: bf16[128,128], index: 3, kind: input, shape index: {}]
  %s4 = inlined_call_operand.vmem [shape: f32[1,128], index: 4, kind: input, shape index: {}]
  %s5 = inlined_call_operand.vmem [shape: bf16[3,128], index: 5, kind: input, shape index: {}]
  %s6 = inlined_call_operand.vmem [shape: f32[3,1], index: 6, kind: input, shape index: {}]
  %s7 = inlined_call_operand.hbm [shape: f32[3,8], index: 7, kind: output, shape index: {}]
  %s8 = sld [smem:[#allocation0]]
  $region50: #{tpu_custom_call.1} parent=0
    _
  %s10 = ssub.s32 1, %s8
  %s11 = scalar_select 0, %s10, %s8
  $region1: #{tpu_custom_call.1} parent=0
    #allocation2 [shape = 'u8[4096]{0}', space=vmem, size = 0x1000, scoped, tag = 'input window, operand 0, single buffered']
    #allocation3 [shape = 's32[1]{0}', space=sflag, size = 0x4, scoped, tag = 'scoped memory for tpu_custom_call.1']
    #allocation4 [shape = 's32[1]{0}', space=sflag, size = 0x4, scoped, tag = 'scoped memory for tpu_custom_call.1']
    #allocation5 [shape = 'u8[26624]{0}', space=vmem, size = 0x6800, scoped, tag = 'input window, operand 1, single buffered']
    #allocation6 [shape = 's32[1]{0}', space=sflag, size = 0x4, scoped, tag = 'scoped memory for tpu_custom_call.1']
    #allocation7 [shape = 'u8[32768]{0}', space=vmem, size = 0x8000, scoped, tag = 'input window, operand 3, single buffered']
    #allocation8 [shape = 'u8[2048]{0}', space=vmem, size = 0x800, scoped, tag = 'output window, operand 0, single buffered']
    %12 = vsyncpa [#allocation3], 0
    %13 = vsyncpa [#allocation6], 0
    %14 = vsyncpa [#allocation4], 0
    // Predicated region
    $region2: #{tpu_custom_call.1} parent=1 // pred_check
      _
    $region3: #{tpu_custom_call.1} parent=1 // pred_check_branch
      %16 = sbr.rel (0) target = $region5
    $region4: #{tpu_custom_call.1} parent=1 // pred_region
      %s18 = ssub.s32 128, 128
      %19 = vsyncadd [#allocation3], %s18
      %s21 = sshll.u32 [#allocation2], 4
      %s22 = int_to_ptr.vmem [resolvable:$true] %s21
      %24 = dma.hbm_to_vmem [thread:$0]  %s0, 128, %s22, [#allocation3]
    $region5: #{tpu_custom_call.1} parent=1 // pred_fallthru
      _
    // Predicated region
    $region6: #{tpu_custom_call.1} parent=1 // pred_check
      _
    $region7: #{tpu_custom_call.1} parent=1 // pred_check_branch
      %26 = sbr.rel (0) target = $region9
    $region8: #{tpu_custom_call.1} parent=1 // pred_region
      %s28 = ssub.s32 832, 832
      %29 = vsyncadd [#allocation6], %s28
      %s30 = sshll.u32 [#allocation5], 4
      %s31 = int_to_ptr.vmem [resolvable:$true] %s30
      %36 = dma.hbm_to_vmem [thread:$0]  %s1, 832, %s31, [#allocation6], 64, 64, 4
    $region9: #{tpu_custom_call.1} parent=1 // pred_fallthru
      _
    // Predicated region
    $region10: #{tpu_custom_call.1} parent=1 // pred_check
      _
    $region11: #{tpu_custom_call.1} parent=1 // pred_check_branch
      %38 = sbr.rel (0) target = $region13
    $region12: #{tpu_custom_call.1} parent=1 // pred_region
      _
    $region13: #{tpu_custom_call.1} parent=1 // pred_fallthru
      _
    // Predicated region
    $region14: #{tpu_custom_call.1} parent=1 // pred_check
      _
    $region15: #{tpu_custom_call.1} parent=1 // pred_check_branch
      %40 = sbr.rel (0) target = $region17
    $region16: #{tpu_custom_call.1} parent=1 // pred_region
      %s42 = ssub.s32 1024, 1024
      %43 = vsyncadd [#allocation6], %s42
      %s44 = sshll.u32 [#allocation7], 4
      %s45 = int_to_ptr.vmem [resolvable:$true] %s44
      %50 = dma.hbm_to_vmem [thread:$0]  %s3, 1024, %s45, [#allocation6], 64, 64, 4
    $region17: #{tpu_custom_call.1} parent=1 // pred_fallthru
      _
    // Predicated region
    $region18: #{tpu_custom_call.1} parent=1 // pred_check
      _
    $region19: #{tpu_custom_call.1} parent=1 // pred_check_branch
      %52 = sbr.rel (0) target = $region21
    $region20: #{tpu_custom_call.1} parent=1 // pred_region
      _
    $region21: #{tpu_custom_call.1} parent=1 // pred_fallthru
      _
    // Predicated region
    $region22: #{tpu_custom_call.1} parent=1 // pred_check
      _
    $region23: #{tpu_custom_call.1} parent=1 // pred_check_branch
      %54 = sbr.rel (0) target = $region25
    $region24: #{tpu_custom_call.1} parent=1 // pred_region
      _
    $region25: #{tpu_custom_call.1} parent=1 // pred_fallthru
      _
    // Predicated region
    $region26: #{tpu_custom_call.1} parent=1 // pred_check
      _
    $region27: #{tpu_custom_call.1} parent=1 // pred_check_branch
      %56 = sbr.rel (0) target = $region29
    $region28: #{tpu_custom_call.1} parent=1 // pred_region
      _
    $region29: #{tpu_custom_call.1} parent=1 // pred_fallthru
      _
    // Predicated region
    $region30: #{tpu_custom_call.1} parent=1 // pred_check
      _
    $region31: #{tpu_custom_call.1} parent=1 // pred_check_branch
      %58 = sbr.rel (0) target = $region33
    $region32: #{tpu_custom_call.1} parent=1 // pred_region
      %59 = dma.done [#allocation3], 128
    $region33: #{tpu_custom_call.1} parent=1 // pred_fallthru
      _
    // Predicated region
    $region34: #{tpu_custom_call.1} parent=1 // pred_check
      _
    $region35: #{tpu_custom_call.1} parent=1 // pred_check_branch
      %61 = sbr.rel (0) target = $region37
    $region36: #{tpu_custom_call.1} parent=1 // pred_region
      %62 = dma.done [#allocation6], 832
    $region37: #{tpu_custom_call.1} parent=1 // pred_fallthru
      _
    // Predicated region
    $region38: #{tpu_custom_call.1} parent=1 // pred_check
      _
    $region39: #{tpu_custom_call.1} parent=1 // pred_check_branch
      %64 = sbr.rel (0) target = $region41
    $region40: #{tpu_custom_call.1} parent=1 // pred_region
      %65 = dma.done [#allocation6], 1024
    $region41: #{tpu_custom_call.1} parent=1 // pred_fallthru
      _
    %v67 = vld [vmem:[#allocation2] sm:$0xff]
    %v68 = vpack.c.bf16 %v67, %v67
    %v69 = vld [vmem:[#allocation5] sm:$0xf]
    %v70 = vld [vmem:[#allocation5 + $0x4] sm:$0xf]
    %v71 = vld [vmem:[#allocation5 + $0x8] sm:$0xf]
    %v72 = vld [vmem:[#allocation5 + $0xc] sm:$0xf]
    %v73 = vld [vmem:[#allocation5 + $0x10] sm:$0xf]
    %v74 = vld [vmem:[#allocation5 + $0x14] sm:$0xf]
    %v75 = vld [vmem:[#allocation5 + $0x18] sm:$0xf]
    %v76 = vld [vmem:[#allocation5 + $0x1c] sm:$0xf]
    %v77 = vld [vmem:[#allocation5 + $0x20] sm:$0xf]
    %v78 = vld [vmem:[#allocation5 + $0x24] sm:$0xf]
    %v79 = vld [vmem:[#allocation5 + $0x28] sm:$0xf]
    %v80 = vld [vmem:[#allocation5 + $0x2c] sm:$0xf]
    %v81 = vld [vmem:[#allocation5 + $0x30] sm:$0x3]
    %v82 = vld [vmem:[%s2] sm:$0x1]
    %v84 = vlaneseq
    %v85 = vshrl.u32 %v84, 7
    %v86 = vsub.s32 0, %v85
    %v87 = vrot.slane %v82, %v86
    %v102 = vunpack.c.l.b16 %v69
    %v103 = vunpack.c.l.b16 %v70
    %v104 = vunpack.c.l.b16 %v71
    %v105 = vunpack.c.l.b16 %v72
    %v106 = vunpack.c.l.b16 %v73
    %v107 = vunpack.c.l.b16 %v74
    %v108 = vunpack.c.l.b16 %v75
    %v109 = vunpack.c.l.b16 %v76
    %v110 = vunpack.c.l.b16 %v77
    %v111 = vunpack.c.l.b16 %v78
    %v112 = vunpack.c.l.b16 %v79
    %v113 = vunpack.c.l.b16 %v80
    %v114 = vunpack.c.l.b16 %v81
    %v115 = vpack.c.b16 %v103, %v102
    %v116 = vpack.c.b16 %v105, %v104
    %v117 = vpack.c.b16 %v107, %v106
    %v118 = vpack.c.b16 %v109, %v108
    %v119 = vpack.c.b16 %v111, %v110
    %v120 = vpack.c.b16 %v113, %v112
    %v121 = vpack.c.b16 %v114, %v114
    %vm128 = vcmask 809984
    %v130 = vsel %vm128, %v68, 0
    %vm132 = vcmask 1040384
    %vm133 = vcmask 1041408
    %v134 = vsel %vm132, 4294967295, 65535
    %v135 = vsel %vm133, %v134, 0
    %v137 = vand.u32 %v121, %v135
    %139 = vmatprep.subr.bf16.mxu0 0
    %140 = vmatpush1.bf16.msra.mxu0 %v115
    %141 = vmatprep.subr.bf16.mxu0 0
    %142 = vmatpush1.bf16.msra.mxu0 %v116
    %143 = vmatprep.subr.bf16.mxu0 0
    %144 = vmatpush1.bf16.msra.mxu0 %v117
    %145 = vmatprep.subr.bf16.mxu0 0
    %146 = vmatpush1.bf16.msra.mxu0 %v118
    %147 = vmatprep.subr.bf16.mxu0 0
    %148 = vmatpush1.bf16.msra.mxu0 %v119
    %149 = vmatprep.subr.bf16.mxu0 0
    %150 = vmatpush1.bf16.msra.mxu0 %v120
    %151 = vmatprep.subr.bf16.mxu0 0
    %152 = vmatpush1.bf16.msra.mxu0 %v137
    %153 = vmatprep.subr.bf16.mxu0 0
    %154 = vmatpush1.bf16.msra.mxu0 0
    %155 = vmatprep.subr.bf16.mxu0 0
    %156 = vmatpush1.bf16.msra.mxu0 0
    %157 = vmatprep.subr.bf16.mxu0 0
    %158 = vmatpush1.bf16.msra.mxu0 0
    %159 = vmatprep.subr.bf16.mxu0 0
    %160 = vmatpush1.bf16.msra.mxu0 0
    %161 = vmatprep.subr.bf16.mxu0 0
    %162 = vmatpush1.bf16.msra.mxu0 0
    %163 = vmatprep.subr.bf16.mxu0 0
    %164 = vmatpush1.bf16.msra.mxu0 0
    %165 = vmatprep.subr.bf16.mxu0 0
    %166 = vmatpush1.bf16.msra.mxu0 0
    %167 = vmatprep.subr.bf16.mxu0 0
    %168 = vmatpush1.bf16.msra.mxu0 0
    %169 = vmatprep.subr.bf16.mxu0 0
    %170 = vmatpush1.bf16.msra.mxu0 0
    %171 = vmatprep.mubr.bf16.mxu0 0
    %172 = vmatmul.mubr.bf16.gmra.mrb[0].mxu0 %v130
    %v173 = vpop.f32.mrb[0].mxu0
    %v174 = vadd.f32 %v87, %v173
    %v175 = vpop.f32.mrb[0].mxu0
    %v176 = vpop.f32.mrb[0].mxu0
    %v177 = vpop.f32.mrb[0].mxu0
    %178 = vdwg.mxu0
    %v179 = vmax.f32 %v174, 0.0
    %v180 = vpack.c.bf16 %v179, %v179
    %v181 = vld [vmem:[#allocation7] sm:$0xf]
    %v182 = vld [vmem:[#allocation7 + $0x4] sm:$0xf]
    %v183 = vld [vmem:[#allocation7 + $0x8] sm:$0xf]
    %v184 = vld [vmem:[#allocation7 + $0xc] sm:$0xf]
    %v185 = vld [vmem:[#allocation7 + $0x10] sm:$0xf]
    %v186 = vld [vmem:[#allocation7 + $0x14] sm:$0xf]
    %v187 = vld [vmem:[#allocation7 + $0x18] sm:$0xf]
    %v188 = vld [vmem:[#allocation7 + $0x1c] sm:$0xf]
    %v189 = vld [vmem:[#allocation7 + $0x20] sm:$0xf]
    %v190 = vld [vmem:[#allocation7 + $0x24] sm:$0xf]
    %v191 = vld [vmem:[#allocation7 + $0x28] sm:$0xf]
    %v192 = vld [vmem:[#allocation7 + $0x2c] sm:$0xf]
    %v193 = vld [vmem:[#allocation7 + $0x30] sm:$0xf]
    %v194 = vld [vmem:[#allocation7 + $0x34] sm:$0xf]
    %v195 = vld [vmem:[#allocation7 + $0x38] sm:$0xf]
    %v196 = vld [vmem:[#allocation7 + $0x3c] sm:$0xf]
    %v197 = vld [vmem:[%s4] sm:$0x1]
    %v199 = vlaneseq
    %v200 = vshrl.u32 %v199, 7
    %v201 = vsub.s32 0, %v200
    %v202 = vrot.slane %v197, %v201
    %v220 = vunpack.c.l.b16 %v181
    %v221 = vunpack.c.l.b16 %v182
    %v222 = vunpack.c.l.b16 %v183
    %v223 = vunpack.c.l.b16 %v184
    %v224 = vunpack.c.l.b16 %v185
    %v225 = vunpack.c.l.b16 %v186
    %v226 = vunpack.c.l.b16 %v187
    %v227 = vunpack.c.l.b16 %v188
    %v228 = vunpack.c.l.b16 %v189
    %v229 = vunpack.c.l.b16 %v190
    %v230 = vunpack.c.l.b16 %v191
    %v231 = vunpack.c.l.b16 %v192
    %v232 = vunpack.c.l.b16 %v193
    %v233 = vunpack.c.l.b16 %v194
    %v234 = vunpack.c.l.b16 %v195
    %v235 = vunpack.c.l.b16 %v196
    %v236 = vpack.c.b16 %v221, %v220
    %v237 = vpack.c.b16 %v223, %v222
    %v238 = vpack.c.b16 %v225, %v224
    %v239 = vpack.c.b16 %v227, %v226
    %v240 = vpack.c.b16 %v229, %v228
    %v241 = vpack.c.b16 %v231, %v230
    %v242 = vpack.c.b16 %v233, %v232
    %v243 = vpack.c.b16 %v235, %v234
    %252 = vmatprep.subr.bf16.mxu0 0
    %253 = vmatpush1.bf16.msra.mxu0 %v236
    %254 = vmatprep.subr.bf16.mxu0 0
    %255 = vmatpush1.bf16.msra.mxu0 %v237
    %256 = vmatprep.subr.bf16.mxu0 0
    %257 = vmatpush1.bf16.msra.mxu0 %v238
    %258 = vmatprep.subr.bf16.mxu0 0
    %259 = vmatpush1.bf16.msra.mxu0 %v239
    %260 = vmatprep.subr.bf16.mxu0 0
    %261 = vmatpush1.bf16.msra.mxu0 %v240
    %262 = vmatprep.subr.bf16.mxu0 0
    %263 = vmatpush1.bf16.msra.mxu0 %v241
    %264 = vmatprep.subr.bf16.mxu0 0
    %265 = vmatpush1.bf16.msra.mxu0 %v242
    %266 = vmatprep.subr.bf16.mxu0 0
    %267 = vmatpush1.bf16.msra.mxu0 %v243
    %268 = vmatprep.subr.bf16.mxu0 0
    %269 = vmatpush1.bf16.msra.mxu0 0
    %270 = vmatprep.subr.bf16.mxu0 0
    %271 = vmatpush1.bf16.msra.mxu0 0
    %272 = vmatprep.subr.bf16.mxu0 0
    %273 = vmatpush1.bf16.msra.mxu0 0
    %274 = vmatprep.subr.bf16.mxu0 0
    %275 = vmatpush1.bf16.msra.mxu0 0
    %276 = vmatprep.subr.bf16.mxu0 0
    %277 = vmatpush1.bf16.msra.mxu0 0
    %278 = vmatprep.subr.bf16.mxu0 0
    %279 = vmatpush1.bf16.msra.mxu0 0
    %280 = vmatprep.subr.bf16.mxu0 0
    %281 = vmatpush1.bf16.msra.mxu0 0
    %282 = vmatprep.subr.bf16.mxu0 0
    %283 = vmatpush1.bf16.msra.mxu0 0
    %284 = vmatprep.mubr.bf16.mxu0 0
    %285 = vmatmul.mubr.bf16.gmra.mrb[0].mxu0 %v180
    %v286 = vpop.f32.mrb[0].mxu0
    %v287 = vadd.f32 %v202, %v286
    %v288 = vpop.f32.mrb[0].mxu0
    %v289 = vpop.f32.mrb[0].mxu0
    %v290 = vpop.f32.mrb[0].mxu0
    %291 = vdwg.mxu0
    %v292 = vmax.f32 %v287, 0.0
    %293 = vxpose.xlu0.b32.start [1/16] %v292, 128
    %294 = vxpose.xlu0.b32.cont [2/16] 0.0, 128
    %295 = vxpose.xlu0.b32.cont [3/16] 0.0, 128
    %296 = vxpose.xlu0.b32.cont [4/16] 0.0, 128
    %297 = vxpose.xlu0.b32.cont [5/16] 0.0, 128
    %298 = vxpose.xlu0.b32.cont [6/16] 0.0, 128
    %299 = vxpose.xlu0.b32.cont [7/16] 0.0, 128
    %300 = vxpose.xlu0.b32.cont [8/16] 0.0, 128
    %301 = vxpose.xlu0.b32.cont [9/16] 0.0, 128
    %302 = vxpose.xlu0.b32.cont [10/16] 0.0, 128
    %303 = vxpose.xlu0.b32.cont [11/16] 0.0, 128
    %304 = vxpose.xlu0.b32.cont [12/16] 0.0, 128
    %305 = vxpose.xlu0.b32.cont [13/16] 0.0, 128
    %306 = vxpose.xlu0.b32.cont [14/16] 0.0, 128
    %307 = vxpose.xlu0.b32.cont [15/16] 0.0, 128
    %308 = vxpose.xlu0.b32.end [16/16] 0.0, 128
    %v309 = vpop.trf.xlu0
    %v310 = vpop.trf.xlu0
    %v311 = vpop.trf.xlu0
    %v312 = vpop.trf.xlu0
    %v313 = vpop.trf.xlu0
    %v314 = vpop.trf.xlu0
    %v315 = vpop.trf.xlu0
    %v316 = vpop.trf.xlu0
    %v317 = vpop.trf.xlu0
    %v318 = vpop.trf.xlu0
    %v319 = vpop.trf.xlu0
    %v320 = vpop.trf.xlu0
    %v321 = vpop.trf.xlu0
    %v322 = vpop.trf.xlu0
    %v323 = vpop.trf.xlu0
    %v324 = vpop.trf.xlu0
    %v325 = vpack.c.bf16 %v310, %v309
    %v326 = vpack.c.bf16 %v312, %v311
    %v327 = vpack.c.bf16 %v314, %v313
    %v328 = vpack.c.bf16 %v316, %v315
    %v329 = vpack.c.bf16 %v318, %v317
    %v330 = vpack.c.bf16 %v320, %v319
    %v331 = vpack.c.bf16 %v322, %v321
    %v332 = vpack.c.bf16 %v324, %v323
    %v333 = vld [vmem:[%s5] sm:$0x3]
    %v334 = vld [vmem:[%s6] sm:$0x7]
    %336 = vset.pattern.permute.xlu0 0
    %337 = vperm.xlu0 %336, %v334
    %v338 = vpop.permute.xlu0 %337
    %340 = vmatprep.subr.bf16.mxu0 0
    %341 = vmatpush1.bf16.msra.mxu0 %v325
    %342 = vmatprep.subr.bf16.mxu0 0
    %343 = vmatpush1.bf16.msra.mxu0 %v326
    %344 = vmatprep.subr.bf16.mxu0 0
    %345 = vmatpush1.bf16.msra.mxu0 %v327
    %346 = vmatprep.subr.bf16.mxu0 0
    %347 = vmatpush1.bf16.msra.mxu0 %v328
    %348 = vmatprep.subr.bf16.mxu0 0
    %349 = vmatpush1.bf16.msra.mxu0 %v329
    %350 = vmatprep.subr.bf16.mxu0 0
    %351 = vmatpush1.bf16.msra.mxu0 %v330
    %352 = vmatprep.subr.bf16.mxu0 0
    %353 = vmatpush1.bf16.msra.mxu0 %v331
    %354 = vmatprep.subr.bf16.mxu0 0
    %355 = vmatpush1.bf16.msra.mxu0 %v332
    %356 = vmatprep.subr.bf16.mxu0 0
    %357 = vmatpush1.bf16.msra.mxu0 0
    %358 = vmatprep.subr.bf16.mxu0 0
    %359 = vmatpush1.bf16.msra.mxu0 0
    %360 = vmatprep.subr.bf16.mxu0 0
    %361 = vmatpush1.bf16.msra.mxu0 0
    %362 = vmatprep.subr.bf16.mxu0 0
    %363 = vmatpush1.bf16.msra.mxu0 0
    %364 = vmatprep.subr.bf16.mxu0 0
    %365 = vmatpush1.bf16.msra.mxu0 0
    %366 = vmatprep.subr.bf16.mxu0 0
    %367 = vmatpush1.bf16.msra.mxu0 0
    %368 = vmatprep.subr.bf16.mxu0 0
    %369 = vmatpush1.bf16.msra.mxu0 0
    %370 = vmatprep.subr.bf16.mxu0 0
    %371 = vmatpush1.bf16.msra.mxu0 0
    %372 = vmatprep.mubr.bf16.mxu0 0
    %373 = vmatmul.mubr.bf16.gmra.mrb[0].mxu0 %v333
    %v374 = vpop.f32.mrb[0].mxu0
    %v375 = vadd.f32 %v338, %v374
    %v376 = vpop.f32.mrb[0].mxu0
    %v377 = vpop.f32.mrb[0].mxu0
    %v378 = vpop.f32.mrb[0].mxu0
    %379 = vdwg.mxu0
    %vm380 = vcmask 59392
    %381 = vst.msk [vmem:[#allocation8] sm:$0x7] %vm380, %v375
    // Predicated region
    $region42: #{tpu_custom_call.1} parent=1 // pred_check
      _
    $region43: #{tpu_custom_call.1} parent=1 // pred_check_branch
      %383 = sbr.rel (0) target = $region45
    $region44: #{tpu_custom_call.1} parent=1 // pred_region
      %s385 = ssub.s32 64, 64
      %386 = vsyncadd [#allocation4], %s385
      %s388 = sshll.u32 [#allocation8], 4
      %s389 = int_to_ptr.vmem [resolvable:$true] %s388
      %391 = dma.vmem_to_hbm [thread:$0]  %s389, 64, %s7, [#allocation4]
    $region45: #{tpu_custom_call.1} parent=1 // pred_fallthru
      _
    // Predicated region
    $region46: #{tpu_custom_call.1} parent=1 // pred_check
      _
    $region47: #{tpu_custom_call.1} parent=1 // pred_check_branch
      %393 = sbr.rel (0) target = $region49
    $region48: #{tpu_custom_call.1} parent=1 // pred_region
      %394 = dma.done [#allocation4], 64
    $region49: #{tpu_custom_call.1} parent=1 // pred_fallthru
      _
    %395 = vsyncpa [#allocation3], 1
    %396 = vsyncpa [#allocation6], 1
    %397 = vsyncpa [#allocation4], 1

</llo_original>
